<compile_context>
chip_gen: v7x
topology: tpu7x:2x2x1
jax: 0.10.0
libtpu: 0.0.40
codegen_flags: <defaults>
</compile_context>

<pallas_src>
import jax
import jax.numpy as jnp
from jax.experimental import pallas as pl
from jax.experimental.pallas import tpu as pltpu

# ----------------------------- configuration ---------------------------------
NUM_CLASS = 10      # number of identities (num_class)
N_CLS_CTX = 4       # class-specific context tokens (fixed to 4 in the module)
PROMPT_LEN = 2      # learnable prefix/suffix prompt length (must be > 0)
CTX_DIM = 128       # ctx_dim (512 in real CLIP); multiple of 128 -> lane-dense
SEQ_LEN = 16        # tokenized context length (77 in real CLIP; small here)
BATCH = 2

SUFFIX_LEN = SEQ_LEN - (1 + 2 * PROMPT_LEN + N_CLS_CTX)
assert PROMPT_LEN > 0 and SUFFIX_LEN > 0

# Static sequence offset of the class-context segment inside the concatenation.
OFF_CLS = 1 + PROMPT_LEN


# -------------------------------- kernel --------------------------------------
def _make_kernel(b_tile, off_cls, n_cls_ctx):
    """Kernel: one full-tile template store + one cls_ctx overwrite per batch block."""

    def kernel(label_ref,     # (B_pad,)            scalar-prefetch, SMEM
               template_ref,  # (1, S, D)           VMEM, constant block (fetched once)
               cls_ctx_ref,   # (num_class, C, D)   VMEM-resident class-context table
               o_ref):        # (B_TILE, S, D)      output tile
        base = pl.program_id(0) * b_tile

        # 1) Aligned full-tile store of the precomposed, label-independent template.
        o_ref[...] = jnp.broadcast_to(template_ref[...], o_ref.shape)

        # 2) Gather the B_TILE class-context rows from the VMEM-resident table
        #    (dynamic first-axis index from SMEM labels), then a single partial store.
        rows = [cls_ctx_ref[label_ref[base + r]] for r in range(b_tile)]
        o_ref[:, off_cls:off_cls + n_cls_ctx, :] = jnp.stack(rows, axis=0)

    return kernel


# -------------------------------- wrapper --------------------------------------
def prompt_learner_forward(label, params, *, b_tile=8):
    cls_ctx = params["cls_ctx"]
    num_class, n_cls_ctx, d = cls_ctx.shape
    dtype = cls_ctx.dtype
    cast = lambda t: t.astype(dtype)   # module unifies all buffers under one dtype

    # Label-independent template, composed once outside the kernel.
    template = jnp.concatenate(
        [cast(params["token_prefix"]),
         cast(params["prefix_prompt"]),
         jnp.zeros((1, n_cls_ctx, d), dtype),     # placeholder rows, overwritten in-kernel
         cast(params["suffix_prompt"]),
         cast(params["token_suffix"])],
        axis=1)                                   # (1, S, D)
    seq_len = template.shape[1]
    prompt_len = params["prefix_prompt"].shape[1]
    off_cls = 1 + prompt_len

    # Batch blocking (pad B up to a multiple of B_TILE; padded rows use label 0
    # and are sliced off afterwards).
    b = label.shape[0]
    bt = max(1, min(b_tile, b))
    b_pad = pl.cdiv(b, bt) * bt
    labels = jnp.clip(label.astype(jnp.int32), 0, num_class - 1)
    if b_pad != b:
        labels = jnp.concatenate([labels, jnp.zeros((b_pad - b,), jnp.int32)])

    grid_spec = pltpu.PrefetchScalarGridSpec(
        num_scalar_prefetch=1,                    # labels -> SMEM (in-kernel scalar reads)
        grid=(b_pad // bt,),
        in_specs=[
            # Template: constant block index -> fetched once, revisited every step.
            pl.BlockSpec((1, seq_len, d), lambda i, lab: (0, 0, 0)),
            # Whole cls_ctx table resident in VMEM: fetched once per call.
            pl.BlockSpec((num_class, n_cls_ctx, d), lambda i, lab: (0, 0, 0)),
        ],
        out_specs=pl.BlockSpec((bt, seq_len, d), lambda i, lab: (i, 0, 0)),
    )
    out = pl.pallas_call(
        _make_kernel(bt, off_cls, n_cls_ctx),
        out_shape=jax.ShapeDtypeStruct((b_pad, seq_len, d), dtype),
        grid_spec=grid_spec,
        compiler_params=pltpu.CompilerParams(dimension_semantics=("parallel",)),
    )(labels, template, cast(cls_ctx))
    return out[:b]


# Pure-JAX reference (mirrors the PyTorch forward) for correctness checking.
def prompt_learner_reference(label, params):
    b = label.shape[0]
    cls_ctx = jnp.take(params["cls_ctx"], label, axis=0)
    bcast = lambda t: jnp.broadcast_to(t, (b,) + t.shape[1:])
    return jnp.concatenate(
        [bcast(params["token_prefix"]), bcast(params["prefix_prompt"]), cls_ctx,
         bcast(params["suffix_prompt"]), bcast(params["token_suffix"])], axis=1)


# ---------------------------- parameter init -----------------------------------
def init_params(key, dtype=jnp.float32):
    k_cls, k_emb, k_pp, k_sp = jax.random.split(key, 4)
    # Stand-in for token_embedding(clip.tokenize(ctx_init)) computed in __init__.
    embedding = 0.02 * jax.random.normal(k_emb, (1, SEQ_LEN, CTX_DIM), dtype)
    return {
        "cls_ctx": 0.02 * jax.random.normal(k_cls, (NUM_CLASS, N_CLS_CTX, CTX_DIM), dtype),
        "token_prefix": embedding[:, :1, :],
        "token_suffix": embedding[:, PROMPT_LEN + 1 + N_CLS_CTX + PROMPT_LEN:, :],
        "prefix_prompt": 0.02 * jax.random.normal(k_pp, (1, PROMPT_LEN, CTX_DIM), dtype),
        "suffix_prompt": 0.02 * jax.random.normal(k_sp, (1, PROMPT_LEN, CTX_DIM), dtype),
    }


# ---------------------------------- main ----------------------------------------
if __name__ == "__main__":
    key = jax.random.PRNGKey(0)
    params = init_params(key)

    label = jnp.array([3, 7], dtype=jnp.int32)          # (B,) class indices

    out = prompt_learner_forward(label, params)
    out = jax.block_until_ready(out)

    ref = prompt_learner_reference(label, params)
    assert out.shape == (BATCH, SEQ_LEN, CTX_DIM) and out.dtype == ref.dtype
    assert jnp.allclose(out, ref), "Pallas prompt construction mismatch vs reference"
    print("KERNEL_OK")
</pallas_src>

<mosaic_0001>
module attributes {stable_mosaic.version = 11 : i64} {
  func.func @kernel(%arg0: i32, %arg1: memref<2xi32, #tpu.memory_space<smem>>, %arg2: memref<1x16x128xf32, #tpu.memory_space<vmem>>, %arg3: memref<10x4x128xf32, #tpu.memory_space<vmem>>, %arg4: memref<2x16x128xf32, #tpu.memory_space<vmem>>) attributes {dimension_semantics = [#tpu.dimension_semantics<parallel>], iteration_bounds = array<i64: 1>, scalar_prefetch = 1 : i64, scratch_operands = 0 : i64, tpu.core_type = #tpu.core_type<tc>, window_params = [{pipeline_mode = #tpu.pipeline_mode<synchronous>, transform_indices = @transform_0, window_bounds = array<i64: 1, 16, 128>}, {pipeline_mode = #tpu.pipeline_mode<synchronous>, transform_indices = @transform_1, window_bounds = array<i64: 10, 4, 128>}, {transform_indices = @transform_2, window_bounds = array<i64: 2, 16, 128>}]} {
    %c2_i32 = arith.constant 2 : i32
    %0 = arith.muli %arg0, %c2_i32 : i32
    %c0 = arith.constant 0 : index
    %c0_0 = arith.constant 0 : index
    %c0_1 = arith.constant 0 : index
    %1 = vector.load %arg2[%c0, %c0_0, %c0_1] : memref<1x16x128xf32, #tpu.memory_space<vmem>>, vector<1x16x128xf32>
    %2 = vector.shape_cast %1 : vector<1x16x128xf32> to vector<1x16x128xf32>
    %3 = vector.broadcast %2 : vector<1x16x128xf32> to vector<2x16x128xf32>
    %c0_2 = arith.constant 0 : index
    %c0_3 = arith.constant 0 : index
    %c0_4 = arith.constant 0 : index
    %4 = vector.load %arg4[%c0_2, %c0_3, %c0_4] : memref<2x16x128xf32, #tpu.memory_space<vmem>>, vector<2x16x128xf32>
    tpu.vector_store %arg4[%c0_2, %c0_3, %c0_4], %3 {strides = array<i32>} : memref<2x16x128xf32, #tpu.memory_space<vmem>>, vector<2x16x128xf32>,
    %c0_i32 = arith.constant 0 : i32
    %5 = arith.addi %0, %c0_i32 : i32
    %6 = arith.index_cast %5 : i32 to index
    %7 = memref.load %arg1[%6] : memref<2xi32, #tpu.memory_space<smem>>
    %8 = arith.index_cast %7 : i32 to index
    %c0_5 = arith.constant 0 : index
    %c0_6 = arith.constant 0 : index
    %9 = vector.load %arg3[%8, %c0_5, %c0_6] : memref<10x4x128xf32, #tpu.memory_space<vmem>>, vector<1x4x128xf32>
    %10 = vector.shape_cast %9 : vector<1x4x128xf32> to vector<4x128xf32>
    %c1_i32 = arith.constant 1 : i32
    %11 = arith.addi %0, %c1_i32 : i32
    %12 = arith.index_cast %11 : i32 to index
    %13 = memref.load %arg1[%12] : memref<2xi32, #tpu.memory_space<smem>>
    %14 = arith.index_cast %13 : i32 to index
    %c0_7 = arith.constant 0 : index
    %c0_8 = arith.constant 0 : index
    %15 = vector.load %arg3[%14, %c0_7, %c0_8] : memref<10x4x128xf32, #tpu.memory_space<vmem>>, vector<1x4x128xf32>
    %16 = vector.shape_cast %15 : vector<1x4x128xf32> to vector<4x128xf32>
    %17 = vector.shape_cast %10 : vector<4x128xf32> to vector<1x4x128xf32>
    %18 = vector.shape_cast %16 : vector<4x128xf32> to vector<1x4x128xf32>
    %19 = tpu.concatenate %17, %18 in 0 : vector<1x4x128xf32>, vector<1x4x128xf32> -> vector<2x4x128xf32>
    %c0_9 = arith.constant 0 : index
    %c3 = arith.constant 3 : index
    %c0_10 = arith.constant 0 : index
    %20 = vector.load %arg4[%c0_9, %c3, %c0_10] : memref<2x16x128xf32, #tpu.memory_space<vmem>>, vector<2x4x128xf32>
    tpu.vector_store %arg4[%c0_9, %c3, %c0_10], %19 {strides = array<i32>} : memref<2x16x128xf32, #tpu.memory_space<vmem>>, vector<2x4x128xf32>,
    return
  }
  func.func @transform_0(%arg0: i32, %arg1: memref<2xi32, #tpu.memory_space<smem>>) -> (i32, i32, i32) {
    %c0_i32 = arith.constant 0 : i32
    %c0_i32_0 = arith.constant 0 : i32
    %c0_i32_1 = arith.constant 0 : i32
    %c0_i32_2 = arith.constant 0 : i32
    return %c0_i32, %c0_i32_0, %c0_i32_1 : i32, i32, i32
  }
  func.func @transform_1(%arg0: i32, %arg1: memref<2xi32, #tpu.memory_space<smem>>) -> (i32, i32, i32) {
    %c0_i32 = arith.constant 0 : i32
    %c0_i32_0 = arith.constant 0 : i32
    %c0_i32_1 = arith.constant 0 : i32
    %c0_i32_2 = arith.constant 0 : i32
    return %c0_i32, %c0_i32_0, %c0_i32_1 : i32, i32, i32
  }
  func.func @transform_2(%arg0: i32, %arg1: memref<2xi32, #tpu.memory_space<smem>>) -> (i32, i32, i32) {
    %c0_i32 = arith.constant 0 : i32
    %c0_i32_0 = arith.constant 0 : i32
    %c0_i32_1 = arith.constant 0 : i32
    return %arg0, %c0_i32, %c0_i32_0 : i32, i32, i32
  }
}

</mosaic_0001>

<llo_original>
// kernel: tpu_custom_call.1
$region0: #{tpu_custom_call.1}
  #allocation0 [shape = 'u32[]', space=smem, size = 0x4, offset = 0x4, fixed_abs, tag = 'smem constant byte address 0x4 - core index']
  #allocation1 [shape = 'u32[144,128]{1,0:T(1,128)}', space=vmem, size = 0x12000, scoped, tag = 'internal scratch']
  #allocation2 [shape = 's32[1]{0}', space=sflag, size = 0x4, scoped, tag = 'scoped memory for tpu_custom_call.1']
  #allocation3 [shape = 'u8[512]{0}', space=smem, size = 0x200, scoped, tag = 'prefetched SMEM operand 0']
  %s0 = inlined_call_operand.hbm [shape: s32[2], index: 0, kind: input, shape index: {}]
  %s1 = inlined_call_operand.hbm [shape: f32[1,16,128], index: 1, kind: input, shape index: {}]
  %s2 = inlined_call_operand.hbm [shape: f32[10,4,128], index: 2, kind: input, shape index: {}]
  %s3 = inlined_call_operand.hbm [shape: f32[2,16,128], index: 3, kind: output, shape index: {}]
  %s4 = sld [smem:[#allocation0]]
  $region26: #{tpu_custom_call.1} parent=0
    _
  %s6 = ssub.s32 1, %s4
  %s7 = scalar_select 0, %s6, %s4
  %9 = dma.hbm_to_smem %s0, 16, [#allocation3], [#allocation2]
  %10 = dma.done [#allocation2], 16
  %11 = sfence
  $region1: #{tpu_custom_call.1} parent=0
    #allocation4 [shape = 'u8[8192]{0}', space=vmem, size = 0x2000, scoped, tag = 'input window, operand 1, single buffered']
    #allocation5 [shape = 's32[1]{0}', space=sflag, size = 0x4, scoped, tag = 'scoped memory for tpu_custom_call.1']
    #allocation6 [shape = 's32[1]{0}', space=sflag, size = 0x4, scoped, tag = 'scoped memory for tpu_custom_call.1']
    #allocation7 [shape = 'u8[20480]{0}', space=vmem, size = 0x5000, scoped, tag = 'input window, operand 2, single buffered']
    #allocation8 [shape = 's32[1]{0}', space=sflag, size = 0x4, scoped, tag = 'scoped memory for tpu_custom_call.1']
    #allocation9 [shape = 'u8[16384]{0}', space=vmem, size = 0x4000, scoped, tag = 'output window, operand 0, single buffered']
    %12 = vsyncpa [#allocation5], 0
    %13 = vsyncpa [#allocation8], 0
    %14 = vsyncpa [#allocation6], 0
    // Predicated region
    $region2: #{tpu_custom_call.1} parent=1 // pred_check
      _
    $region3: #{tpu_custom_call.1} parent=1 // pred_check_branch
      %16 = sbr.rel (0) target = $region5
    $region4: #{tpu_custom_call.1} parent=1 // pred_region
      %s18 = ssub.s32 256, 256
      %19 = vsyncadd [#allocation5], %s18
      %s20 = sshll.u32 [#allocation4], 4
      %s21 = int_to_ptr.vmem [resolvable:$true] %s20
      %26 = dma.hbm_to_vmem [thread:$0]  %s1, 256, %s21, [#allocation5], 128, 128, 8
    $region5: #{tpu_custom_call.1} parent=1 // pred_fallthru
      _
    // Predicated region
    $region6: #{tpu_custom_call.1} parent=1 // pred_check
      _
    $region7: #{tpu_custom_call.1} parent=1 // pred_check_branch
      %28 = sbr.rel (0) target = $region9
    $region8: #{tpu_custom_call.1} parent=1 // pred_region
      %s30 = ssub.s32 640, 640
      %31 = vsyncadd [#allocation8], %s30
      %s32 = sshll.u32 [#allocation7], 4
      %s33 = int_to_ptr.vmem [resolvable:$true] %s32
      %38 = dma.hbm_to_vmem [thread:$0]  %s2, 640, %s33, [#allocation8], 64, 64, 4
    $region9: #{tpu_custom_call.1} parent=1 // pred_fallthru
      _
    // Predicated region
    $region10: #{tpu_custom_call.1} parent=1 // pred_check
      _
    $region11: #{tpu_custom_call.1} parent=1 // pred_check_branch
      %40 = sbr.rel (0) target = $region13
    $region12: #{tpu_custom_call.1} parent=1 // pred_region
      %41 = dma.done [#allocation5], 256
    $region13: #{tpu_custom_call.1} parent=1 // pred_fallthru
      _
    // Predicated region
    $region14: #{tpu_custom_call.1} parent=1 // pred_check
      _
    $region15: #{tpu_custom_call.1} parent=1 // pred_check_branch
      %43 = sbr.rel (0) target = $region17
    $region16: #{tpu_custom_call.1} parent=1 // pred_region
      %44 = dma.done [#allocation8], 640
    $region17: #{tpu_custom_call.1} parent=1 // pred_fallthru
      _
    %s45 = smul.u32 0, 2
    %v46 = vld [vmem:[#allocation4] sm:$0xff]
    %v47 = vld [vmem:[#allocation4 + $0x8] sm:$0xff]
    %48 = vst [vmem:[#allocation9] sm:$0xff] %v46
    %49 = vst [vmem:[#allocation9 + $0x8] sm:$0xff] %v47
    %50 = vst [vmem:[#allocation9 + $0x10] sm:$0xff] %v46
    %51 = vst [vmem:[#allocation9 + $0x18] sm:$0xff] %v47
    %s52 = sld [smem:[#allocation3 + %s45]]
    %s53 = smul.u32 %s52, 4
    %s54 = scalar_lea.vmem [#allocation7], %s53
    %v55 = vld [vmem:[%s54] sm:$0xf]
    %s56 = sadd.s32 %s45, 1
    %s57 = sld [smem:[#allocation3 + %s56]]
    %s58 = smul.u32 %s57, 4
    %s59 = scalar_lea.vmem [#allocation7], %s58
    %v60 = vld [vmem:[%s59] sm:$0xf]
    %61 = vst [vmem:[#allocation9 + $0x3] sm:$0xf] %v55
    %62 = vst [vmem:[#allocation9 + $0x13] sm:$0xf] %v60
    // Predicated region
    $region18: #{tpu_custom_call.1} parent=1 // pred_check
      _
    $region19: #{tpu_custom_call.1} parent=1 // pred_check_branch
      %64 = sbr.rel (0) target = $region21
    $region20: #{tpu_custom_call.1} parent=1 // pred_region
      %s66 = ssub.s32 512, 512
      %67 = vsyncadd [#allocation6], %s66
      %s68 = sshll.u32 [#allocation9], 4
      %s69 = int_to_ptr.vmem [resolvable:$true] %s68
      %74 = dma.vmem_to_hbm [thread:$0]  %s69, 512, %s3, [#allocation6], 128, 128, 8
    $region21: #{tpu_custom_call.1} parent=1 // pred_fallthru
      _
    // Predicated region
    $region22: #{tpu_custom_call.1} parent=1 // pred_check
      _
    $region23: #{tpu_custom_call.1} parent=1 // pred_check_branch
      %76 = sbr.rel (0) target = $region25
    $region24: #{tpu_custom_call.1} parent=1 // pred_region
      %77 = dma.done [#allocation6], 512
    $region25: #{tpu_custom_call.1} parent=1 // pred_fallthru
      _
    %78 = vsyncpa [#allocation5], 1
    %79 = vsyncpa [#allocation8], 1
    %80 = vsyncpa [#allocation6], 1

</llo_original>
